<compile_context>
chip_gen: v6e
topology: v6e:2x2x1
jax: 0.10.0
libtpu: 0.0.40
codegen_flags: <defaults>
</compile_context>

<pallas_src>
import functools

import jax
import jax.numpy as jnp
import numpy as np
from jax import lax
from jax.experimental import pallas as pl
from jax.experimental.pallas import tpu as pltpu


def _round_up(a, m):
    return ((a + m - 1) // m) * m


def _device_kind():
    try:
        return jax.devices()[0].device_kind.lower()
    except Exception:
        return ""


def _default_compute_dtype():
    """bf16 VPU path on v6e/v7x; f32 everywhere else (v5e has no bf16 VALU)."""
    kind = _device_kind()
    if ("v6" in kind) or ("v7" in kind) or ("tpu7" in kind):
        return jnp.bfloat16
    return jnp.float32


def _vmem_limit_bytes():
    """Generation-aware VMEM budget (v7x: 64 MiB physical vs 128 MiB on v5e/v6e)."""
    kind = _device_kind()
    phys = (64 << 20) if ("v7" in kind or "tpu7" in kind) else (128 << 20)
    try:
        info = pltpu.get_tpu_info()
        phys = int(getattr(info, "vmem_capacity_bytes", phys))
    except Exception:
        pass
    # leave headroom for XLA / concurrently-live allocations
    return int(min(phys * 3 // 4, 100 << 20))


def _syntactic_kernel(x_ref, w_ref, b_ref, w1_ref, b1_ref, w2_ref, b2_ref,
                      o_ref, h_ref, *, channel, chunk, unroll, compute_dtype):
    C = channel
    cdt = compute_dtype
    rows = o_ref.shape[0]

    # ---- Linear(input_dim, hidden_dim) + ReLU on the MXU (f32 accumulate) ----
    # TODO(synk): for large input_dim, skew this matmul chunk-by-chunk against the
    # VALU loop below to hide the MXU phase; negligible at input_dim=16.
    h = jnp.dot(x_ref[...], w_ref[...], preferred_element_type=jnp.float32)
    h = jnp.maximum(h + b_ref[...], 0.0)              # (rows, Hp) f32
    h_ref[...] = h.astype(cdt)                        # stash in VMEM scratch

    # ---- hoist all tiny-MLP scalars (SMEM reads) out of the chunk loop ----
    w1 = [w1_ref[c].astype(cdt) for c in range(C)]
    b1 = [b1_ref[c].astype(cdt) for c in range(C)]
    b2 = [b2_ref[k].astype(cdt) for k in range(C)]
    w2 = [[w2_ref[k, c].astype(cdt) for c in range(C)] for k in range(C)]

    n_chunks = (rows + chunk - 1) // chunk            # static
    aligned = (rows % chunk == 0)                     # static
    last_start = rows - chunk                         # static, >= 0 (chunk <= rows)

    # ---- per-scalar channel MLP, chunked so only ~C+4 arrays are live at once ----
    def body(i, carry):
        if aligned:
            r0 = pl.multiple_of(i * chunk, chunk)
        else:
            # clamp the ragged final chunk so VMEM refs are never indexed OOB;
            # the few overlapped rows are recomputed with identical results.
            r0 = jnp.minimum(i * chunk, last_start)
        t = h_ref[pl.ds(r0, chunk), :]                                   # (chunk, Hp)
        # Linear(1, C) + ReLU, fully unrolled on the VPU
        a = [jnp.maximum(t * w1[c] + b1[c], 0.0) for c in range(C)]
        # Linear(C, C) + outer ReLU; sum over output channels accumulated in f32
        out = None
        for k in range(C):
            acc = a[0] * w2[k][0] + b2[k]             # b2 folded into first term
            for c in range(1, C):
                acc = acc + a[c] * w2[k][c]
            zk = jnp.maximum(acc, 0.0).astype(jnp.float32)
            out = zk if out is None else out + zk
        o_ref[pl.ds(r0, chunk), :] = out.astype(o_ref.dtype)
        return carry

    lax.fori_loop(0, n_chunks, body, 0, unroll=min(unroll, n_chunks))


def syntactic_extractor(x, W, b, w1, b1, w2, b2, *,
                        tile_rows=512, compute_dtype=None):
    """x: (N, input_dim); W: (input_dim, hidden_dim) [= torch weight.T]; b: (1, hidden_dim).
    Returns (N, hidden_dim) float32."""
    N, D = x.shape
    H = W.shape[1]
    C = w2.shape[0]
    if compute_dtype is None:
        compute_dtype = _default_compute_dtype()
    bf16_path = (compute_dtype == jnp.bfloat16)

    # dtype of the x tiles / packed weight fed to the MXU (bf16 halves HBM + VMEM;
    # accumulation stays f32). Output is kept f32 to match the module exactly.
    mx_dtype = jnp.bfloat16 if bf16_path else x.dtype

    # --- lane packing: fold `pack` consecutive rows into the lane axis ----------
    # TODO(synk): when 128 % H != 0 (pack stays 1 and H not a lane multiple) pad W's
    # output columns to a 128 multiple to keep stores lane-dense.
    pack = 128 // H if (H < 128 and 128 % H == 0) else 1
    Hp, Dp = H * pack, D * pack

    # Minimal padding: only up to a multiple of `pack` (<= pack-1 rows, usually 0),
    # so the (N, D) -> (N/pack, D*pack) reshape stays metadata-only.  No padding to
    # tile alignment: Pallas handles the ragged last grid block and clips OOB stores.
    N_al = _round_up(N, pack)
    x_c = x.astype(mx_dtype)
    if N_al != N:
        x_c = jnp.pad(x_c, ((0, N_al - N), (0, 0)))
    packed_rows = N_al // pack
    x_p = x_c.reshape(packed_rows, Dp)

    # block-diagonal W keeps packed rows independent; bias tiled across packed lanes.
    # TODO(synk): for large input_dim, matmul un-packed and lane-repack h in-kernel
    # instead (block-diag W does pack-x redundant MXU work and pack^2-x W VMEM).
    Wb = jnp.zeros((Dp, Hp), jnp.float32)
    for p in range(pack):
        Wb = Wb.at[p * D:(p + 1) * D, p * H:(p + 1) * H].set(W.astype(jnp.float32))
    Wb = Wb.astype(mx_dtype)
    bb = jnp.tile(b.reshape(1, H).astype(jnp.float32), (1, pack))

    # --- per-generation chunking of the VALU hot loop ----------------------------
    # bf16 gens (v6e/v7x): chunk=32 keeps all 4 VALU slots busy, ~25-30 live vregs.
    # f32 gen (v5e): chunk=16 + unroll=2 avoids spilling C=8 f32 temporaries.
    chunk, unroll = (32, 1) if bf16_path else (16, 2)

    # --- generation-aware VMEM budget (includes W / bias double buffers) ---------
    vmem_limit = _vmem_limit_bytes()
    mx_bytes = jnp.dtype(mx_dtype).itemsize
    c_bytes = jnp.dtype(compute_dtype).itemsize
    fixed = 2 * Dp * Hp * mx_bytes + 2 * Hp * 4                 # W + bias (dbl buffered)
    per_row = 2 * Dp * mx_bytes + 2 * Hp * 4 + Hp * c_bytes     # x(dbl) + out(dbl) + h
    headroom = 2 << 20
    cap = max(chunk, ((vmem_limit - headroom - fixed) // per_row) // chunk * chunk)
    tile_rows = max(chunk, min(_round_up(int(tile_rows), chunk), cap))

    if packed_rows <= tile_rows:
        # single grid step whose block exactly matches the (small) array
        tile_rows = packed_rows
        chunk = min(chunk, tile_rows)
    grid_steps = pl.cdiv(packed_rows, tile_rows)

    kernel = functools.partial(_syntactic_kernel, channel=C, chunk=chunk,
                               unroll=unroll, compute_dtype=compute_dtype)

    out_packed = pl.pallas_call(
        kernel,
        out_shape=jax.ShapeDtypeStruct((packed_rows, Hp), jnp.float32),
        grid_spec=pltpu.PrefetchScalarGridSpec(
            num_scalar_prefetch=0,
            grid=(grid_steps,),
            in_specs=[
                pl.BlockSpec((tile_rows, Dp), lambda i: (i, 0)),    # x tile
                pl.BlockSpec((Dp, Hp), lambda i: (0, 0)),           # W (grid-invariant)
                pl.BlockSpec((1, Hp), lambda i: (0, 0)),            # bias (grid-invariant)
                pl.BlockSpec(memory_space=pltpu.MemorySpace.SMEM),  # w1 (C,)
                pl.BlockSpec(memory_space=pltpu.MemorySpace.SMEM),  # b1 (C,)
                pl.BlockSpec(memory_space=pltpu.MemorySpace.SMEM),  # w2 (C,C)
                pl.BlockSpec(memory_space=pltpu.MemorySpace.SMEM),  # b2 (C,)
            ],
            out_specs=pl.BlockSpec((tile_rows, Hp), lambda i: (i, 0)),
            scratch_shapes=[pltpu.VMEM((tile_rows, Hp), compute_dtype)],
        ),
        compiler_params=pltpu.CompilerParams(
            # TODO(synk): on v7x confirm both TensorCores are used; if not, switch the
            # row-tile axis to pltpu.CORE_PARALLEL / explicit 2-way core split.
            dimension_semantics=("parallel",),
            vmem_limit_bytes=int(vmem_limit)),
    )(x_p, Wb, bb, w1, b1, w2, b2)

    # metadata-only reshape back to rows; slice only in the rare ragged-pack case
    out = out_packed.reshape(N_al, H)
    return out if N_al == N else out[:N]


def _reference(x, W, b, w1, b1, w2, b2):
    h = jnp.maximum(x @ W + b, 0.0)                              # (N, H)
    a = jnp.maximum(h[..., None] * w1 + b1, 0.0)                 # (N, H, C)
    z = jnp.maximum(jnp.einsum("nhc,kc->nhk", a, w2) + b2, 0.0)  # (N, H, C)
    return z.sum(axis=2)


if __name__ == "__main__":
    # small shapes consistent with the module
    N, input_dim, hidden_dim, channel = 16, 16, 32, 8

    key = jax.random.PRNGKey(0)
    k = jax.random.split(key, 7)

    def uinit(kk, shape, fan_in):
        lim = 1.0 / np.sqrt(fan_in)
        return jax.random.uniform(kk, shape, jnp.float32, -lim, lim)

    x = jax.random.normal(k[0], (N, input_dim), jnp.float32)

    W = uinit(k[1], (input_dim, hidden_dim), input_dim)    # linear_layer.weight.T
    b = uinit(k[2], (1, hidden_dim), input_dim)            # linear_layer.bias
    w1 = uinit(k[3], (channel,), 1)                        # linear_module[0].weight[:, 0]
    b1 = uinit(k[4], (channel,), 1)                        # linear_module[0].bias
    w2 = uinit(k[5], (channel, channel), channel)          # linear_module[2].weight
    b2 = uinit(k[6], (channel,), channel)                  # linear_module[2].bias

    cdt = _default_compute_dtype()
    out = syntactic_extractor(x, W, b, w1, b1, w2, b2, compute_dtype=cdt)
    out = jax.block_until_ready(out)

    ref = _reference(x, W, b[0], w1, b1, w2, b2)
    if cdt == jnp.bfloat16:
        tol = dict(rtol=5e-2, atol=5e-2)   # bf16 channel-MLP path (v6e / v7x)
    else:
        tol = dict(rtol=1e-5, atol=1e-5)   # f32 path (v5e and older)
    np.testing.assert_allclose(np.asarray(out), np.asarray(ref), **tol)

    print("KERNEL_OK")
</pallas_src>

<mosaic_0001>
module attributes {stable_mosaic.version = 11 : i64} {
  func.func @_syntactic_kernel(%arg0: i32, %arg1: memref<4x64xf32, #tpu.memory_space<vmem>>, %arg2: memref<64x128xf32, #tpu.memory_space<vmem>>, %arg3: memref<1x128xf32, #tpu.memory_space<vmem>>, %arg4: memref<8xf32, #tpu.memory_space<smem>>, %arg5: memref<8xf32, #tpu.memory_space<smem>>, %arg6: memref<8x8xf32, #tpu.memory_space<smem>>, %arg7: memref<8xf32, #tpu.memory_space<smem>>, %arg8: memref<4x128xf32, #tpu.memory_space<vmem>>, %arg9: memref<4x128xf32, #tpu.memory_space<vmem>>) attributes {dimension_semantics = [#tpu.dimension_semantics<parallel>], iteration_bounds = array<i64: 1>, scalar_prefetch = 0 : i64, scratch_operands = 1 : i64, tpu.core_type = #tpu.core_type<tc>, window_params = [{transform_indices = @transform_0, window_bounds = array<i64: 4, 64>}, {pipeline_mode = #tpu.pipeline_mode<synchronous>, transform_indices = @transform_1, window_bounds = array<i64: 64, 128>}, {pipeline_mode = #tpu.pipeline_mode<synchronous>, transform_indices = @transform_2, window_bounds = array<i64: 1, 128>}, {transform_indices = @transform_3, window_bounds = array<i64: 8>}, {transform_indices = @transform_4, window_bounds = array<i64: 8>}, {transform_indices = @transform_5, window_bounds = array<i64: 8, 8>}, {transform_indices = @transform_6, window_bounds = array<i64: 8>}, {transform_indices = @transform_7, window_bounds = array<i64: 4, 128>}]} {
    %c0 = arith.constant 0 : index
    %c0_0 = arith.constant 0 : index
    %0 = vector.load %arg1[%c0, %c0_0] : memref<4x64xf32, #tpu.memory_space<vmem>>, vector<4x64xf32>
    %c0_1 = arith.constant 0 : index
    %c0_2 = arith.constant 0 : index
    %1 = vector.load %arg2[%c0_1, %c0_2] : memref<64x128xf32, #tpu.memory_space<vmem>>, vector<64x128xf32>
    %cst = arith.constant dense<0.000000e+00> : vector<4x128xf32>
    %2 = tpu.matmul %0, %1, %cst {dimension_numbers = #tpu.dot_dimension_numbers<[1], [0], [0], [1], [0, 0, 1, 1], [], []>} : vector<4x64xf32>, vector<64x128xf32>, vector<4x128xf32> -> vector<4x128xf32>
    %c0_3 = arith.constant 0 : index
    %c0_4 = arith.constant 0 : index
    %3 = vector.load %arg3[%c0_3, %c0_4] : memref<1x128xf32, #tpu.memory_space<vmem>>, vector<1x128xf32>
    %4 = vector.broadcast %3 : vector<1x128xf32> to vector<4x128xf32>
    %5 = arith.addf %2, %4 : vector<4x128xf32>
    %cst_5 = arith.constant 0.000000e+00 : f32
    %6 = vector.broadcast %cst_5 : f32 to vector<4x128xf32>
    %7 = arith.maximumf %5, %6 : vector<4x128xf32>
    %c0_6 = arith.constant 0 : index
    %c0_7 = arith.constant 0 : index
    %8 = vector.load %arg9[%c0_6, %c0_7] : memref<4x128xf32, #tpu.memory_space<vmem>>, vector<4x128xf32>
    tpu.vector_store %arg9[%c0_6, %c0_7], %7 {strides = array<i32>} : memref<4x128xf32, #tpu.memory_space<vmem>>, vector<4x128xf32>,
    %c0_8 = arith.constant 0 : index
    %9 = memref.load %arg4[%c0_8] : memref<8xf32, #tpu.memory_space<smem>>
    %c1 = arith.constant 1 : index
    %10 = memref.load %arg4[%c1] : memref<8xf32, #tpu.memory_space<smem>>
    %c2 = arith.constant 2 : index
    %11 = memref.load %arg4[%c2] : memref<8xf32, #tpu.memory_space<smem>>
    %c3 = arith.constant 3 : index
    %12 = memref.load %arg4[%c3] : memref<8xf32, #tpu.memory_space<smem>>
    %c4 = arith.constant 4 : index
    %13 = memref.load %arg4[%c4] : memref<8xf32, #tpu.memory_space<smem>>
    %c5 = arith.constant 5 : index
    %14 = memref.load %arg4[%c5] : memref<8xf32, #tpu.memory_space<smem>>
    %c6 = arith.constant 6 : index
    %15 = memref.load %arg4[%c6] : memref<8xf32, #tpu.memory_space<smem>>
    %c7 = arith.constant 7 : index
    %16 = memref.load %arg4[%c7] : memref<8xf32, #tpu.memory_space<smem>>
    %c0_9 = arith.constant 0 : index
    %17 = memref.load %arg5[%c0_9] : memref<8xf32, #tpu.memory_space<smem>>
    %c1_10 = arith.constant 1 : index
    %18 = memref.load %arg5[%c1_10] : memref<8xf32, #tpu.memory_space<smem>>
    %c2_11 = arith.constant 2 : index
    %19 = memref.load %arg5[%c2_11] : memref<8xf32, #tpu.memory_space<smem>>
    %c3_12 = arith.constant 3 : index
    %20 = memref.load %arg5[%c3_12] : memref<8xf32, #tpu.memory_space<smem>>
    %c4_13 = arith.constant 4 : index
    %21 = memref.load %arg5[%c4_13] : memref<8xf32, #tpu.memory_space<smem>>
    %c5_14 = arith.constant 5 : index
    %22 = memref.load %arg5[%c5_14] : memref<8xf32, #tpu.memory_space<smem>>
    %c6_15 = arith.constant 6 : index
    %23 = memref.load %arg5[%c6_15] : memref<8xf32, #tpu.memory_space<smem>>
    %c7_16 = arith.constant 7 : index
    %24 = memref.load %arg5[%c7_16] : memref<8xf32, #tpu.memory_space<smem>>
    %c0_17 = arith.constant 0 : index
    %25 = memref.load %arg7[%c0_17] : memref<8xf32, #tpu.memory_space<smem>>
    %c1_18 = arith.constant 1 : index
    %26 = memref.load %arg7[%c1_18] : memref<8xf32, #tpu.memory_space<smem>>
    %c2_19 = arith.constant 2 : index
    %27 = memref.load %arg7[%c2_19] : memref<8xf32, #tpu.memory_space<smem>>
    %c3_20 = arith.constant 3 : index
    %28 = memref.load %arg7[%c3_20] : memref<8xf32, #tpu.memory_space<smem>>
    %c4_21 = arith.constant 4 : index
    %29 = memref.load %arg7[%c4_21] : memref<8xf32, #tpu.memory_space<smem>>
    %c5_22 = arith.constant 5 : index
    %30 = memref.load %arg7[%c5_22] : memref<8xf32, #tpu.memory_space<smem>>
    %c6_23 = arith.constant 6 : index
    %31 = memref.load %arg7[%c6_23] : memref<8xf32, #tpu.memory_space<smem>>
    %c7_24 = arith.constant 7 : index
    %32 = memref.load %arg7[%c7_24] : memref<8xf32, #tpu.memory_space<smem>>
    %c0_25 = arith.constant 0 : index
    %c0_26 = arith.constant 0 : index
    %33 = memref.load %arg6[%c0_25, %c0_26] : memref<8x8xf32, #tpu.memory_space<smem>>
    %c0_27 = arith.constant 0 : index
    %c1_28 = arith.constant 1 : index
    %34 = memref.load %arg6[%c0_27, %c1_28] : memref<8x8xf32, #tpu.memory_space<smem>>
    %c0_29 = arith.constant 0 : index
    %c2_30 = arith.constant 2 : index
    %35 = memref.load %arg6[%c0_29, %c2_30] : memref<8x8xf32, #tpu.memory_space<smem>>
    %c0_31 = arith.constant 0 : index
    %c3_32 = arith.constant 3 : index
    %36 = memref.load %arg6[%c0_31, %c3_32] : memref<8x8xf32, #tpu.memory_space<smem>>
    %c0_33 = arith.constant 0 : index
    %c4_34 = arith.constant 4 : index
    %37 = memref.load %arg6[%c0_33, %c4_34] : memref<8x8xf32, #tpu.memory_space<smem>>
    %c0_35 = arith.constant 0 : index
    %c5_36 = arith.constant 5 : index
    %38 = memref.load %arg6[%c0_35, %c5_36] : memref<8x8xf32, #tpu.memory_space<smem>>
    %c0_37 = arith.constant 0 : index
    %c6_38 = arith.constant 6 : index
    %39 = memref.load %arg6[%c0_37, %c6_38] : memref<8x8xf32, #tpu.memory_space<smem>>
    %c0_39 = arith.constant 0 : index
    %c7_40 = arith.constant 7 : index
    %40 = memref.load %arg6[%c0_39, %c7_40] : memref<8x8xf32, #tpu.memory_space<smem>>
    %c1_41 = arith.constant 1 : index
    %c0_42 = arith.constant 0 : index
    %41 = memref.load %arg6[%c1_41, %c0_42] : memref<8x8xf32, #tpu.memory_space<smem>>
    %c1_43 = arith.constant 1 : index
    %c1_44 = arith.constant 1 : index
    %42 = memref.load %arg6[%c1_43, %c1_44] : memref<8x8xf32, #tpu.memory_space<smem>>
    %c1_45 = arith.constant 1 : index
    %c2_46 = arith.constant 2 : index
    %43 = memref.load %arg6[%c1_45, %c2_46] : memref<8x8xf32, #tpu.memory_space<smem>>
    %c1_47 = arith.constant 1 : index
    %c3_48 = arith.constant 3 : index
    %44 = memref.load %arg6[%c1_47, %c3_48] : memref<8x8xf32, #tpu.memory_space<smem>>
    %c1_49 = arith.constant 1 : index
    %c4_50 = arith.constant 4 : index
    %45 = memref.load %arg6[%c1_49, %c4_50] : memref<8x8xf32, #tpu.memory_space<smem>>
    %c1_51 = arith.constant 1 : index
    %c5_52 = arith.constant 5 : index
    %46 = memref.load %arg6[%c1_51, %c5_52] : memref<8x8xf32, #tpu.memory_space<smem>>
    %c1_53 = arith.constant 1 : index
    %c6_54 = arith.constant 6 : index
    %47 = memref.load %arg6[%c1_53, %c6_54] : memref<8x8xf32, #tpu.memory_space<smem>>
    %c1_55 = arith.constant 1 : index
    %c7_56 = arith.constant 7 : index
    %48 = memref.load %arg6[%c1_55, %c7_56] : memref<8x8xf32, #tpu.memory_space<smem>>
    %c2_57 = arith.constant 2 : index
    %c0_58 = arith.constant 0 : index
    %49 = memref.load %arg6[%c2_57, %c0_58] : memref<8x8xf32, #tpu.memory_space<smem>>
    %c2_59 = arith.constant 2 : index
    %c1_60 = arith.constant 1 : index
    %50 = memref.load %arg6[%c2_59, %c1_60] : memref<8x8xf32, #tpu.memory_space<smem>>
    %c2_61 = arith.constant 2 : index
    %c2_62 = arith.constant 2 : index
    %51 = memref.load %arg6[%c2_61, %c2_62] : memref<8x8xf32, #tpu.memory_space<smem>>
    %c2_63 = arith.constant 2 : index
    %c3_64 = arith.constant 3 : index
    %52 = memref.load %arg6[%c2_63, %c3_64] : memref<8x8xf32, #tpu.memory_space<smem>>
    %c2_65 = arith.constant 2 : index
    %c4_66 = arith.constant 4 : index
    %53 = memref.load %arg6[%c2_65, %c4_66] : memref<8x8xf32, #tpu.memory_space<smem>>
    %c2_67 = arith.constant 2 : index
    %c5_68 = arith.constant 5 : index
    %54 = memref.load %arg6[%c2_67, %c5_68] : memref<8x8xf32, #tpu.memory_space<smem>>
    %c2_69 = arith.constant 2 : index
    %c6_70 = arith.constant 6 : index
    %55 = memref.load %arg6[%c2_69, %c6_70] : memref<8x8xf32, #tpu.memory_space<smem>>
    %c2_71 = arith.constant 2 : index
    %c7_72 = arith.constant 7 : index
    %56 = memref.load %arg6[%c2_71, %c7_72] : memref<8x8xf32, #tpu.memory_space<smem>>
    %c3_73 = arith.constant 3 : index
    %c0_74 = arith.constant 0 : index
    %57 = memref.load %arg6[%c3_73, %c0_74] : memref<8x8xf32, #tpu.memory_space<smem>>
    %c3_75 = arith.constant 3 : index
    %c1_76 = arith.constant 1 : index
    %58 = memref.load %arg6[%c3_75, %c1_76] : memref<8x8xf32, #tpu.memory_space<smem>>
    %c3_77 = arith.constant 3 : index
    %c2_78 = arith.constant 2 : index
    %59 = memref.load %arg6[%c3_77, %c2_78] : memref<8x8xf32, #tpu.memory_space<smem>>
    %c3_79 = arith.constant 3 : index
    %c3_80 = arith.constant 3 : index
    %60 = memref.load %arg6[%c3_79, %c3_80] : memref<8x8xf32, #tpu.memory_space<smem>>
    %c3_81 = arith.constant 3 : index
    %c4_82 = arith.constant 4 : index
    %61 = memref.load %arg6[%c3_81, %c4_82] : memref<8x8xf32, #tpu.memory_space<smem>>
    %c3_83 = arith.constant 3 : index
    %c5_84 = arith.constant 5 : index
    %62 = memref.load %arg6[%c3_83, %c5_84] : memref<8x8xf32, #tpu.memory_space<smem>>
    %c3_85 = arith.constant 3 : index
    %c6_86 = arith.constant 6 : index
    %63 = memref.load %arg6[%c3_85, %c6_86] : memref<8x8xf32, #tpu.memory_space<smem>>
    %c3_87 = arith.constant 3 : index
    %c7_88 = arith.constant 7 : index
    %64 = memref.load %arg6[%c3_87, %c7_88] : memref<8x8xf32, #tpu.memory_space<smem>>
    %c4_89 = arith.constant 4 : index
    %c0_90 = arith.constant 0 : index
    %65 = memref.load %arg6[%c4_89, %c0_90] : memref<8x8xf32, #tpu.memory_space<smem>>
    %c4_91 = arith.constant 4 : index
    %c1_92 = arith.constant 1 : index
    %66 = memref.load %arg6[%c4_91, %c1_92] : memref<8x8xf32, #tpu.memory_space<smem>>
    %c4_93 = arith.constant 4 : index
    %c2_94 = arith.constant 2 : index
    %67 = memref.load %arg6[%c4_93, %c2_94] : memref<8x8xf32, #tpu.memory_space<smem>>
    %c4_95 = arith.constant 4 : index
    %c3_96 = arith.constant 3 : index
    %68 = memref.load %arg6[%c4_95, %c3_96] : memref<8x8xf32, #tpu.memory_space<smem>>
    %c4_97 = arith.constant 4 : index
    %c4_98 = arith.constant 4 : index
    %69 = memref.load %arg6[%c4_97, %c4_98] : memref<8x8xf32, #tpu.memory_space<smem>>
    %c4_99 = arith.constant 4 : index
    %c5_100 = arith.constant 5 : index
    %70 = memref.load %arg6[%c4_99, %c5_100] : memref<8x8xf32, #tpu.memory_space<smem>>
    %c4_101 = arith.constant 4 : index
    %c6_102 = arith.constant 6 : index
    %71 = memref.load %arg6[%c4_101, %c6_102] : memref<8x8xf32, #tpu.memory_space<smem>>
    %c4_103 = arith.constant 4 : index
    %c7_104 = arith.constant 7 : index
    %72 = memref.load %arg6[%c4_103, %c7_104] : memref<8x8xf32, #tpu.memory_space<smem>>
    %c5_105 = arith.constant 5 : index
    %c0_106 = arith.constant 0 : index
    %73 = memref.load %arg6[%c5_105, %c0_106] : memref<8x8xf32, #tpu.memory_space<smem>>
    %c5_107 = arith.constant 5 : index
    %c1_108 = arith.constant 1 : index
    %74 = memref.load %arg6[%c5_107, %c1_108] : memref<8x8xf32, #tpu.memory_space<smem>>
    %c5_109 = arith.constant 5 : index
    %c2_110 = arith.constant 2 : index
    %75 = memref.load %arg6[%c5_109, %c2_110] : memref<8x8xf32, #tpu.memory_space<smem>>
    %c5_111 = arith.constant 5 : index
    %c3_112 = arith.constant 3 : index
    %76 = memref.load %arg6[%c5_111, %c3_112] : memref<8x8xf32, #tpu.memory_space<smem>>
    %c5_113 = arith.constant 5 : index
    %c4_114 = arith.constant 4 : index
    %77 = memref.load %arg6[%c5_113, %c4_114] : memref<8x8xf32, #tpu.memory_space<smem>>
    %c5_115 = arith.constant 5 : index
    %c5_116 = arith.constant 5 : index
    %78 = memref.load %arg6[%c5_115, %c5_116] : memref<8x8xf32, #tpu.memory_space<smem>>
    %c5_117 = arith.constant 5 : index
    %c6_118 = arith.constant 6 : index
    %79 = memref.load %arg6[%c5_117, %c6_118] : memref<8x8xf32, #tpu.memory_space<smem>>
    %c5_119 = arith.constant 5 : index
    %c7_120 = arith.constant 7 : index
    %80 = memref.load %arg6[%c5_119, %c7_120] : memref<8x8xf32, #tpu.memory_space<smem>>
    %c6_121 = arith.constant 6 : index
    %c0_122 = arith.constant 0 : index
    %81 = memref.load %arg6[%c6_121, %c0_122] : memref<8x8xf32, #tpu.memory_space<smem>>
    %c6_123 = arith.constant 6 : index
    %c1_124 = arith.constant 1 : index
    %82 = memref.load %arg6[%c6_123, %c1_124] : memref<8x8xf32, #tpu.memory_space<smem>>
    %c6_125 = arith.constant 6 : index
    %c2_126 = arith.constant 2 : index
    %83 = memref.load %arg6[%c6_125, %c2_126] : memref<8x8xf32, #tpu.memory_space<smem>>
    %c6_127 = arith.constant 6 : index
    %c3_128 = arith.constant 3 : index
    %84 = memref.load %arg6[%c6_127, %c3_128] : memref<8x8xf32, #tpu.memory_space<smem>>
    %c6_129 = arith.constant 6 : index
    %c4_130 = arith.constant 4 : index
    %85 = memref.load %arg6[%c6_129, %c4_130] : memref<8x8xf32, #tpu.memory_space<smem>>
    %c6_131 = arith.constant 6 : index
    %c5_132 = arith.constant 5 : index
    %86 = memref.load %arg6[%c6_131, %c5_132] : memref<8x8xf32, #tpu.memory_space<smem>>
    %c6_133 = arith.constant 6 : index
    %c6_134 = arith.constant 6 : index
    %87 = memref.load %arg6[%c6_133, %c6_134] : memref<8x8xf32, #tpu.memory_space<smem>>
    %c6_135 = arith.constant 6 : index
    %c7_136 = arith.constant 7 : index
    %88 = memref.load %arg6[%c6_135, %c7_136] : memref<8x8xf32, #tpu.memory_space<smem>>
    %c7_137 = arith.constant 7 : index
    %c0_138 = arith.constant 0 : index
    %89 = memref.load %arg6[%c7_137, %c0_138] : memref<8x8xf32, #tpu.memory_space<smem>>
    %c7_139 = arith.constant 7 : index
    %c1_140 = arith.constant 1 : index
    %90 = memref.load %arg6[%c7_139, %c1_140] : memref<8x8xf32, #tpu.memory_space<smem>>
    %c7_141 = arith.constant 7 : index
    %c2_142 = arith.constant 2 : index
    %91 = memref.load %arg6[%c7_141, %c2_142] : memref<8x8xf32, #tpu.memory_space<smem>>
    %c7_143 = arith.constant 7 : index
    %c3_144 = arith.constant 3 : index
    %92 = memref.load %arg6[%c7_143, %c3_144] : memref<8x8xf32, #tpu.memory_space<smem>>
    %c7_145 = arith.constant 7 : index
    %c4_146 = arith.constant 4 : index
    %93 = memref.load %arg6[%c7_145, %c4_146] : memref<8x8xf32, #tpu.memory_space<smem>>
    %c7_147 = arith.constant 7 : index
    %c5_148 = arith.constant 5 : index
    %94 = memref.load %arg6[%c7_147, %c5_148] : memref<8x8xf32, #tpu.memory_space<smem>>
    %c7_149 = arith.constant 7 : index
    %c6_150 = arith.constant 6 : index
    %95 = memref.load %arg6[%c7_149, %c6_150] : memref<8x8xf32, #tpu.memory_space<smem>>
    %c7_151 = arith.constant 7 : index
    %c7_152 = arith.constant 7 : index
    %96 = memref.load %arg6[%c7_151, %c7_152] : memref<8x8xf32, #tpu.memory_space<smem>>
    %c0_i32 = arith.constant 0 : i32
    %c4_i32 = arith.constant 4 : i32
    %97 = arith.muli %c0_i32, %c4_i32 : i32
    %98 = tpu.assume_multiple %97, 4 : i32
    %99 = arith.index_cast %98 : i32 to index
    %c0_153 = arith.constant 0 : index
    %100 = vector.load %arg9[%99, %c0_153] : memref<4x128xf32, #tpu.memory_space<vmem>>, vector<4x128xf32>
    %101 = vector.broadcast %9 : f32 to vector<4x128xf32>
    %102 = arith.mulf %100, %101 : vector<4x128xf32>
    %103 = vector.broadcast %17 : f32 to vector<4x128xf32>
    %104 = arith.addf %102, %103 : vector<4x128xf32>
    %cst_154 = arith.constant 0.000000e+00 : f32
    %105 = vector.broadcast %cst_154 : f32 to vector<4x128xf32>
    %106 = arith.maximumf %104, %105 : vector<4x128xf32>
    %107 = vector.broadcast %10 : f32 to vector<4x128xf32>
    %108 = arith.mulf %100, %107 : vector<4x128xf32>
    %109 = vector.broadcast %18 : f32 to vector<4x128xf32>
    %110 = arith.addf %108, %109 : vector<4x128xf32>
    %cst_155 = arith.constant 0.000000e+00 : f32
    %111 = vector.broadcast %cst_155 : f32 to vector<4x128xf32>
    %112 = arith.maximumf %110, %111 : vector<4x128xf32>
    %113 = vector.broadcast %11 : f32 to vector<4x128xf32>
    %114 = arith.mulf %100, %113 : vector<4x128xf32>
    %115 = vector.broadcast %19 : f32 to vector<4x128xf32>
    %116 = arith.addf %114, %115 : vector<4x128xf32>
    %cst_156 = arith.constant 0.000000e+00 : f32
    %117 = vector.broadcast %cst_156 : f32 to vector<4x128xf32>
    %118 = arith.maximumf %116, %117 : vector<4x128xf32>
    %119 = vector.broadcast %12 : f32 to vector<4x128xf32>
    %120 = arith.mulf %100, %119 : vector<4x128xf32>
    %121 = vector.broadcast %20 : f32 to vector<4x128xf32>
    %122 = arith.addf %120, %121 : vector<4x128xf32>
    %cst_157 = arith.constant 0.000000e+00 : f32
    %123 = vector.broadcast %cst_157 : f32 to vector<4x128xf32>
    %124 = arith.maximumf %122, %123 : vector<4x128xf32>
    %125 = vector.broadcast %13 : f32 to vector<4x128xf32>
    %126 = arith.mulf %100, %125 : vector<4x128xf32>
    %127 = vector.broadcast %21 : f32 to vector<4x128xf32>
    %128 = arith.addf %126, %127 : vector<4x128xf32>
    %cst_158 = arith.constant 0.000000e+00 : f32
    %129 = vector.broadcast %cst_158 : f32 to vector<4x128xf32>
    %130 = arith.maximumf %128, %129 : vector<4x128xf32>
    %131 = vector.broadcast %14 : f32 to vector<4x128xf32>
    %132 = arith.mulf %100, %131 : vector<4x128xf32>
    %133 = vector.broadcast %22 : f32 to vector<4x128xf32>
    %134 = arith.addf %132, %133 : vector<4x128xf32>
    %cst_159 = arith.constant 0.000000e+00 : f32
    %135 = vector.broadcast %cst_159 : f32 to vector<4x128xf32>
    %136 = arith.maximumf %134, %135 : vector<4x128xf32>
    %137 = vector.broadcast %15 : f32 to vector<4x128xf32>
    %138 = arith.mulf %100, %137 : vector<4x128xf32>
    %139 = vector.broadcast %23 : f32 to vector<4x128xf32>
    %140 = arith.addf %138, %139 : vector<4x128xf32>
    %cst_160 = arith.constant 0.000000e+00 : f32
    %141 = vector.broadcast %cst_160 : f32 to vector<4x128xf32>
    %142 = arith.maximumf %140, %141 : vector<4x128xf32>
    %143 = vector.broadcast %16 : f32 to vector<4x128xf32>
    %144 = arith.mulf %100, %143 : vector<4x128xf32>
    %145 = vector.broadcast %24 : f32 to vector<4x128xf32>
    %146 = arith.addf %144, %145 : vector<4x128xf32>
    %cst_161 = arith.constant 0.000000e+00 : f32
    %147 = vector.broadcast %cst_161 : f32 to vector<4x128xf32>
    %148 = arith.maximumf %146, %147 : vector<4x128xf32>
    %149 = vector.broadcast %33 : f32 to vector<4x128xf32>
    %150 = arith.mulf %106, %149 : vector<4x128xf32>
    %151 = vector.broadcast %25 : f32 to vector<4x128xf32>
    %152 = arith.addf %150, %151 : vector<4x128xf32>
    %153 = vector.broadcast %34 : f32 to vector<4x128xf32>
    %154 = arith.mulf %112, %153 : vector<4x128xf32>
    %155 = arith.addf %152, %154 : vector<4x128xf32>
    %156 = vector.broadcast %35 : f32 to vector<4x128xf32>
    %157 = arith.mulf %118, %156 : vector<4x128xf32>
    %158 = arith.addf %155, %157 : vector<4x128xf32>
    %159 = vector.broadcast %36 : f32 to vector<4x128xf32>
    %160 = arith.mulf %124, %159 : vector<4x128xf32>
    %161 = arith.addf %158, %160 : vector<4x128xf32>
    %162 = vector.broadcast %37 : f32 to vector<4x128xf32>
    %163 = arith.mulf %130, %162 : vector<4x128xf32>
    %164 = arith.addf %161, %163 : vector<4x128xf32>
    %165 = vector.broadcast %38 : f32 to vector<4x128xf32>
    %166 = arith.mulf %136, %165 : vector<4x128xf32>
    %167 = arith.addf %164, %166 : vector<4x128xf32>
    %168 = vector.broadcast %39 : f32 to vector<4x128xf32>
    %169 = arith.mulf %142, %168 : vector<4x128xf32>
    %170 = arith.addf %167, %169 : vector<4x128xf32>
    %171 = vector.broadcast %40 : f32 to vector<4x128xf32>
    %172 = arith.mulf %148, %171 : vector<4x128xf32>
    %173 = arith.addf %170, %172 : vector<4x128xf32>
    %cst_162 = arith.constant 0.000000e+00 : f32
    %174 = vector.broadcast %cst_162 : f32 to vector<4x128xf32>
    %175 = arith.maximumf %173, %174 : vector<4x128xf32>
    %176 = vector.broadcast %41 : f32 to vector<4x128xf32>
    %177 = arith.mulf %106, %176 : vector<4x128xf32>
    %178 = vector.broadcast %26 : f32 to vector<4x128xf32>
    %179 = arith.addf %177, %178 : vector<4x128xf32>
    %180 = vector.broadcast %42 : f32 to vector<4x128xf32>
    %181 = arith.mulf %112, %180 : vector<4x128xf32>
    %182 = arith.addf %179, %181 : vector<4x128xf32>
    %183 = vector.broadcast %43 : f32 to vector<4x128xf32>
    %184 = arith.mulf %118, %183 : vector<4x128xf32>
    %185 = arith.addf %182, %184 : vector<4x128xf32>
    %186 = vector.broadcast %44 : f32 to vector<4x128xf32>
    %187 = arith.mulf %124, %186 : vector<4x128xf32>
    %188 = arith.addf %185, %187 : vector<4x128xf32>
    %189 = vector.broadcast %45 : f32 to vector<4x128xf32>
    %190 = arith.mulf %130, %189 : vector<4x128xf32>
    %191 = arith.addf %188, %190 : vector<4x128xf32>
    %192 = vector.broadcast %46 : f32 to vector<4x128xf32>
    %193 = arith.mulf %136, %192 : vector<4x128xf32>
    %194 = arith.addf %191, %193 : vector<4x128xf32>
    %195 = vector.broadcast %47 : f32 to vector<4x128xf32>
    %196 = arith.mulf %142, %195 : vector<4x128xf32>
    %197 = arith.addf %194, %196 : vector<4x128xf32>
    %198 = vector.broadcast %48 : f32 to vector<4x128xf32>
    %199 = arith.mulf %148, %198 : vector<4x128xf32>
    %200 = arith.addf %197, %199 : vector<4x128xf32>
    %cst_163 = arith.constant 0.000000e+00 : f32
    %201 = vector.broadcast %cst_163 : f32 to vector<4x128xf32>
    %202 = arith.maximumf %200, %201 : vector<4x128xf32>
    %203 = arith.addf %175, %202 : vector<4x128xf32>
    %204 = vector.broadcast %49 : f32 to vector<4x128xf32>
    %205 = arith.mulf %106, %204 : vector<4x128xf32>
    %206 = vector.broadcast %27 : f32 to vector<4x128xf32>
    %207 = arith.addf %205, %206 : vector<4x128xf32>
    %208 = vector.broadcast %50 : f32 to vector<4x128xf32>
    %209 = arith.mulf %112, %208 : vector<4x128xf32>
    %210 = arith.addf %207, %209 : vector<4x128xf32>
    %211 = vector.broadcast %51 : f32 to vector<4x128xf32>
    %212 = arith.mulf %118, %211 : vector<4x128xf32>
    %213 = arith.addf %210, %212 : vector<4x128xf32>
    %214 = vector.broadcast %52 : f32 to vector<4x128xf32>
    %215 = arith.mulf %124, %214 : vector<4x128xf32>
    %216 = arith.addf %213, %215 : vector<4x128xf32>
    %217 = vector.broadcast %53 : f32 to vector<4x128xf32>
    %218 = arith.mulf %130, %217 : vector<4x128xf32>
    %219 = arith.addf %216, %218 : vector<4x128xf32>
    %220 = vector.broadcast %54 : f32 to vector<4x128xf32>
    %221 = arith.mulf %136, %220 : vector<4x128xf32>
    %222 = arith.addf %219, %221 : vector<4x128xf32>
    %223 = vector.broadcast %55 : f32 to vector<4x128xf32>
    %224 = arith.mulf %142, %223 : vector<4x128xf32>
    %225 = arith.addf %222, %224 : vector<4x128xf32>
    %226 = vector.broadcast %56 : f32 to vector<4x128xf32>
    %227 = arith.mulf %148, %226 : vector<4x128xf32>
    %228 = arith.addf %225, %227 : vector<4x128xf32>
    %cst_164 = arith.constant 0.000000e+00 : f32
    %229 = vector.broadcast %cst_164 : f32 to vector<4x128xf32>
    %230 = arith.maximumf %228, %229 : vector<4x128xf32>
    %231 = arith.addf %203, %230 : vector<4x128xf32>
    %232 = vector.broadcast %57 : f32 to vector<4x128xf32>
    %233 = arith.mulf %106, %232 : vector<4x128xf32>
    %234 = vector.broadcast %28 : f32 to vector<4x128xf32>
    %235 = arith.addf %233, %234 : vector<4x128xf32>
    %236 = vector.broadcast %58 : f32 to vector<4x128xf32>
    %237 = arith.mulf %112, %236 : vector<4x128xf32>
    %238 = arith.addf %235, %237 : vector<4x128xf32>
    %239 = vector.broadcast %59 : f32 to vector<4x128xf32>
    %240 = arith.mulf %118, %239 : vector<4x128xf32>
    %241 = arith.addf %238, %240 : vector<4x128xf32>
    %242 = vector.broadcast %60 : f32 to vector<4x128xf32>
    %243 = arith.mulf %124, %242 : vector<4x128xf32>
    %244 = arith.addf %241, %243 : vector<4x128xf32>
    %245 = vector.broadcast %61 : f32 to vector<4x128xf32>
    %246 = arith.mulf %130, %245 : vector<4x128xf32>
    %247 = arith.addf %244, %246 : vector<4x128xf32>
    %248 = vector.broadcast %62 : f32 to vector<4x128xf32>
    %249 = arith.mulf %136, %248 : vector<4x128xf32>
    %250 = arith.addf %247, %249 : vector<4x128xf32>
    %251 = vector.broadcast %63 : f32 to vector<4x128xf32>
    %252 = arith.mulf %142, %251 : vector<4x128xf32>
    %253 = arith.addf %250, %252 : vector<4x128xf32>
    %254 = vector.broadcast %64 : f32 to vector<4x128xf32>
    %255 = arith.mulf %148, %254 : vector<4x128xf32>
    %256 = arith.addf %253, %255 : vector<4x128xf32>
    %cst_165 = arith.constant 0.000000e+00 : f32
    %257 = vector.broadcast %cst_165 : f32 to vector<4x128xf32>
    %258 = arith.maximumf %256, %257 : vector<4x128xf32>
    %259 = arith.addf %231, %258 : vector<4x128xf32>
    %260 = vector.broadcast %65 : f32 to vector<4x128xf32>
    %261 = arith.mulf %106, %260 : vector<4x128xf32>
    %262 = vector.broadcast %29 : f32 to vector<4x128xf32>
    %263 = arith.addf %261, %262 : vector<4x128xf32>
    %264 = vector.broadcast %66 : f32 to vector<4x128xf32>
    %265 = arith.mulf %112, %264 : vector<4x128xf32>
    %266 = arith.addf %263, %265 : vector<4x128xf32>
    %267 = vector.broadcast %67 : f32 to vector<4x128xf32>
    %268 = arith.mulf %118, %267 : vector<4x128xf32>
    %269 = arith.addf %266, %268 : vector<4x128xf32>
    %270 = vector.broadcast %68 : f32 to vector<4x128xf32>
    %271 = arith.mulf %124, %270 : vector<4x128xf32>
    %272 = arith.addf %269, %271 : vector<4x128xf32>
    %273 = vector.broadcast %69 : f32 to vector<4x128xf32>
    %274 = arith.mulf %130, %273 : vector<4x128xf32>
    %275 = arith.addf %272, %274 : vector<4x128xf32>
    %276 = vector.broadcast %70 : f32 to vector<4x128xf32>
    %277 = arith.mulf %136, %276 : vector<4x128xf32>
    %278 = arith.addf %275, %277 : vector<4x128xf32>
    %279 = vector.broadcast %71 : f32 to vector<4x128xf32>
    %280 = arith.mulf %142, %279 : vector<4x128xf32>
    %281 = arith.addf %278, %280 : vector<4x128xf32>
    %282 = vector.broadcast %72 : f32 to vector<4x128xf32>
    %283 = arith.mulf %148, %282 : vector<4x128xf32>
    %284 = arith.addf %281, %283 : vector<4x128xf32>
    %cst_166 = arith.constant 0.000000e+00 : f32
    %285 = vector.broadcast %cst_166 : f32 to vector<4x128xf32>
    %286 = arith.maximumf %284, %285 : vector<4x128xf32>
    %287 = arith.addf %259, %286 : vector<4x128xf32>
    %288 = vector.broadcast %73 : f32 to vector<4x128xf32>
    %289 = arith.mulf %106, %288 : vector<4x128xf32>
    %290 = vector.broadcast %30 : f32 to vector<4x128xf32>
    %291 = arith.addf %289, %290 : vector<4x128xf32>
    %292 = vector.broadcast %74 : f32 to vector<4x128xf32>
    %293 = arith.mulf %112, %292 : vector<4x128xf32>
    %294 = arith.addf %291, %293 : vector<4x128xf32>
    %295 = vector.broadcast %75 : f32 to vector<4x128xf32>
    %296 = arith.mulf %118, %295 : vector<4x128xf32>
    %297 = arith.addf %294, %296 : vector<4x128xf32>
    %298 = vector.broadcast %76 : f32 to vector<4x128xf32>
    %299 = arith.mulf %124, %298 : vector<4x128xf32>
    %300 = arith.addf %297, %299 : vector<4x128xf32>
    %301 = vector.broadcast %77 : f32 to vector<4x128xf32>
    %302 = arith.mulf %130, %301 : vector<4x128xf32>
    %303 = arith.addf %300, %302 : vector<4x128xf32>
    %304 = vector.broadcast %78 : f32 to vector<4x128xf32>
    %305 = arith.mulf %136, %304 : vector<4x128xf32>
    %306 = arith.addf %303, %305 : vector<4x128xf32>
    %307 = vector.broadcast %79 : f32 to vector<4x128xf32>
    %308 = arith.mulf %142, %307 : vector<4x128xf32>
    %309 = arith.addf %306, %308 : vector<4x128xf32>
    %310 = vector.broadcast %80 : f32 to vector<4x128xf32>
    %311 = arith.mulf %148, %310 : vector<4x128xf32>
    %312 = arith.addf %309, %311 : vector<4x128xf32>
    %cst_167 = arith.constant 0.000000e+00 : f32
    %313 = vector.broadcast %cst_167 : f32 to vector<4x128xf32>
    %314 = arith.maximumf %312, %313 : vector<4x128xf32>
    %315 = arith.addf %287, %314 : vector<4x128xf32>
    %316 = vector.broadcast %81 : f32 to vector<4x128xf32>
    %317 = arith.mulf %106, %316 : vector<4x128xf32>
    %318 = vector.broadcast %31 : f32 to vector<4x128xf32>
    %319 = arith.addf %317, %318 : vector<4x128xf32>
    %320 = vector.broadcast %82 : f32 to vector<4x128xf32>
    %321 = arith.mulf %112, %320 : vector<4x128xf32>
    %322 = arith.addf %319, %321 : vector<4x128xf32>
    %323 = vector.broadcast %83 : f32 to vector<4x128xf32>
    %324 = arith.mulf %118, %323 : vector<4x128xf32>
    %325 = arith.addf %322, %324 : vector<4x128xf32>
    %326 = vector.broadcast %84 : f32 to vector<4x128xf32>
    %327 = arith.mulf %124, %326 : vector<4x128xf32>
    %328 = arith.addf %325, %327 : vector<4x128xf32>
    %329 = vector.broadcast %85 : f32 to vector<4x128xf32>
    %330 = arith.mulf %130, %329 : vector<4x128xf32>
    %331 = arith.addf %328, %330 : vector<4x128xf32>
    %332 = vector.broadcast %86 : f32 to vector<4x128xf32>
    %333 = arith.mulf %136, %332 : vector<4x128xf32>
    %334 = arith.addf %331, %333 : vector<4x128xf32>
    %335 = vector.broadcast %87 : f32 to vector<4x128xf32>
    %336 = arith.mulf %142, %335 : vector<4x128xf32>
    %337 = arith.addf %334, %336 : vector<4x128xf32>
    %338 = vector.broadcast %88 : f32 to vector<4x128xf32>
    %339 = arith.mulf %148, %338 : vector<4x128xf32>
    %340 = arith.addf %337, %339 : vector<4x128xf32>
    %cst_168 = arith.constant 0.000000e+00 : f32
    %341 = vector.broadcast %cst_168 : f32 to vector<4x128xf32>
    %342 = arith.maximumf %340, %341 : vector<4x128xf32>
    %343 = arith.addf %315, %342 : vector<4x128xf32>
    %344 = vector.broadcast %89 : f32 to vector<4x128xf32>
    %345 = arith.mulf %106, %344 : vector<4x128xf32>
    %346 = vector.broadcast %32 : f32 to vector<4x128xf32>
    %347 = arith.addf %345, %346 : vector<4x128xf32>
    %348 = vector.broadcast %90 : f32 to vector<4x128xf32>
    %349 = arith.mulf %112, %348 : vector<4x128xf32>
    %350 = arith.addf %347, %349 : vector<4x128xf32>
    %351 = vector.broadcast %91 : f32 to vector<4x128xf32>
    %352 = arith.mulf %118, %351 : vector<4x128xf32>
    %353 = arith.addf %350, %352 : vector<4x128xf32>
    %354 = vector.broadcast %92 : f32 to vector<4x128xf32>
    %355 = arith.mulf %124, %354 : vector<4x128xf32>
    %356 = arith.addf %353, %355 : vector<4x128xf32>
    %357 = vector.broadcast %93 : f32 to vector<4x128xf32>
    %358 = arith.mulf %130, %357 : vector<4x128xf32>
    %359 = arith.addf %356, %358 : vector<4x128xf32>
    %360 = vector.broadcast %94 : f32 to vector<4x128xf32>
    %361 = arith.mulf %136, %360 : vector<4x128xf32>
    %362 = arith.addf %359, %361 : vector<4x128xf32>
    %363 = vector.broadcast %95 : f32 to vector<4x128xf32>
    %364 = arith.mulf %142, %363 : vector<4x128xf32>
    %365 = arith.addf %362, %364 : vector<4x128xf32>
    %366 = vector.broadcast %96 : f32 to vector<4x128xf32>
    %367 = arith.mulf %148, %366 : vector<4x128xf32>
    %368 = arith.addf %365, %367 : vector<4x128xf32>
    %cst_169 = arith.constant 0.000000e+00 : f32
    %369 = vector.broadcast %cst_169 : f32 to vector<4x128xf32>
    %370 = arith.maximumf %368, %369 : vector<4x128xf32>
    %371 = arith.addf %343, %370 : vector<4x128xf32>
    %372 = arith.index_cast %98 : i32 to index
    %c0_170 = arith.constant 0 : index
    %373 = vector.load %arg8[%372, %c0_170] : memref<4x128xf32, #tpu.memory_space<vmem>>, vector<4x128xf32>
    tpu.vector_store %arg8[%372, %c0_170], %371 {strides = array<i32>} : memref<4x128xf32, #tpu.memory_space<vmem>>, vector<4x128xf32>,
    %c1_i32 = arith.constant 1 : i32
    return
  }
  func.func @transform_0(%arg0: i32) -> (i32, i32) {
    %c0_i32 = arith.constant 0 : i32
    %c0_i32_0 = arith.constant 0 : i32
    return %arg0, %c0_i32 : i32, i32
  }
  func.func @transform_1(%arg0: i32) -> (i32, i32) {
    %c0_i32 = arith.constant 0 : i32
    %c0_i32_0 = arith.constant 0 : i32
    %c0_i32_1 = arith.constant 0 : i32
    return %c0_i32, %c0_i32_0 : i32, i32
  }
  func.func @transform_2(%arg0: i32) -> (i32, i32) {
    %c0_i32 = arith.constant 0 : i32
    %c0_i32_0 = arith.constant 0 : i32
    %c0_i32_1 = arith.constant 0 : i32
    return %c0_i32, %c0_i32_0 : i32, i32
  }
  func.func @transform_3(%arg0: i32) -> i32 {
    %c0_i32 = arith.constant 0 : i32
    %c0_i32_0 = arith.constant 0 : i32
    return %c0_i32 : i32
  }
  func.func @transform_4(%arg0: i32) -> i32 {
    %c0_i32 = arith.constant 0 : i32
    %c0_i32_0 = arith.constant 0 : i32
    return %c0_i32 : i32
  }
  func.func @transform_5(%arg0: i32) -> (i32, i32) {
    %c0_i32 = arith.constant 0 : i32
    %c0_i32_0 = arith.constant 0 : i32
    %c0_i32_1 = arith.constant 0 : i32
    return %c0_i32, %c0_i32_0 : i32, i32
  }
  func.func @transform_6(%arg0: i32) -> i32 {
    %c0_i32 = arith.constant 0 : i32
    %c0_i32_0 = arith.constant 0 : i32
    return %c0_i32 : i32
  }
  func.func @transform_7(%arg0: i32) -> (i32, i32) {
    %c0_i32 = arith.constant 0 : i32
    %c0_i32_0 = arith.constant 0 : i32
    return %arg0, %c0_i32 : i32, i32
  }
}

</mosaic_0001>

<llo_original>
// kernel: tpu_custom_call.1
$region0: #{tpu_custom_call.1}
  #allocation0 [shape = 'u32[]', space=smem, size = 0x4, offset = 0x4, fixed_abs, tag = 'smem constant byte address 0x4 - core index']
  #allocation1 [shape = 'u32[144,128]{1,0:T(1,128)}', space=vmem, size = 0x12000, scoped, tag = 'internal scratch']
  #allocation2 [shape = 'f32[4,128]{1,0:T(4,128)}', space=vmem, size = 0x800, scoped, tag = 'scratch operand']
  %s0 = inlined_call_operand.hbm [shape: f32[4,64], index: 0, kind: input, shape index: {}]
  %s1 = inlined_call_operand.hbm [shape: f32[64,128], index: 1, kind: input, shape index: {}]
  %s2 = inlined_call_operand.vmem [shape: f32[1,128], index: 2, kind: input, shape index: {}]
  %s3 = inlined_call_operand.hbm [shape: f32[8], index: 3, kind: input, shape index: {}]
  %s4 = inlined_call_operand.hbm [shape: f32[8], index: 4, kind: input, shape index: {}]
  %s5 = inlined_call_operand.vmem [shape: f32[8,8], index: 5, kind: input, shape index: {}]
  %s6 = inlined_call_operand.vmem [shape: f32[8], index: 6, kind: input, shape index: {}]
  %s7 = inlined_call_operand.hbm [shape: f32[4,128], index: 7, kind: output, shape index: {}]
  %s8 = sld [smem:[#allocation0]]
  $region62: #{tpu_custom_call.1} parent=0
    _
  %s10 = ssub.s32 1, %s8
  %s11 = scalar_select 0, %s10, %s8
  $region1: #{tpu_custom_call.1} parent=0
    #allocation3 [shape = 'u8[2048]{0}', space=vmem, size = 0x800, scoped, tag = 'input window, operand 0, single buffered']
    #allocation4 [shape = 's32[1]{0}', space=sflag, size = 0x4, scoped, tag = 'scoped memory for tpu_custom_call.1']
    #allocation5 [shape = 's32[1]{0}', space=sflag, size = 0x4, scoped, tag = 'scoped memory for tpu_custom_call.1']
    #allocation6 [shape = 's32[1]{0}', space=sflag, size = 0x4, scoped, tag = 'scoped memory for tpu_custom_call.1']
    #allocation7 [shape = 's32[1]{0}', space=sflag, size = 0x4, scoped, tag = 'scoped memory for tpu_custom_call.1']
    #allocation8 [shape = 'u8[32768]{0}', space=vmem, size = 0x8000, scoped, tag = 'input window, operand 1, single buffered']
    #allocation9 [shape = 's32[1]{0}', space=sflag, size = 0x4, scoped, tag = 'scoped memory for tpu_custom_call.1']
    #allocation10 [shape = 'u8[512]{0}', space=smem, size = 0x200, scoped, tag = 'input window, operand 3, single buffered']
    #allocation11 [shape = 'u8[512]{0}', space=smem, size = 0x200, scoped, tag = 'input window, operand 4, single buffered']
    #allocation12 [shape = 's32[1]{0}', space=sflag, size = 0x4, scoped, tag = 'scoped memory for tpu_custom_call.1']
    #allocation13 [shape = 'u8[4096]{0}', space=smem, size = 0x1000, scoped, tag = 'input window, operand 5, single buffered']
    #allocation14 [shape = 'u8[512]{0}', space=smem, size = 0x200, scoped, tag = 'input window, operand 6, single buffered']
    #allocation15 [shape = 's32[1]{0}', space=sflag, size = 0x4, scoped, tag = 'scoped memory for tpu_custom_call.1']
    #allocation16 [shape = 'u8[2048]{0}', space=vmem, size = 0x800, scoped, tag = 'output window, operand 0, single buffered']
    %12 = vsyncpa [#allocation4], 0
    %13 = vsyncpa [#allocation9], 0
    %14 = vsyncpa [#allocation6], 0
    %15 = vsyncpa [#allocation12], 0
    %16 = vsyncpa [#allocation7], 0
    %17 = vsyncpa [#allocation15], 0
    %18 = vsyncpa [#allocation5], 0
    // Predicated region
    $region2: #{tpu_custom_call.1} parent=1 // pred_check
      _
    $region3: #{tpu_custom_call.1} parent=1 // pred_check_branch
      %20 = sbr.rel (0) target = $region5
    $region4: #{tpu_custom_call.1} parent=1 // pred_region
      %s22 = ssub.s32 64, 64
      %23 = vsyncadd [#allocation4], %s22
      %s25 = sshll.u32 [#allocation3], 4
      %s26 = int_to_ptr.vmem [resolvable:$true] %s25
      %28 = dma.hbm_to_vmem [thread:$0]  %s0, 64, %s26, [#allocation4]
    $region5: #{tpu_custom_call.1} parent=1 // pred_fallthru
      _
    // Predicated region
    $region6: #{tpu_custom_call.1} parent=1 // pred_check
      _
    $region7: #{tpu_custom_call.1} parent=1 // pred_check_branch
      %30 = sbr.rel (0) target = $region9
    $region8: #{tpu_custom_call.1} parent=1 // pred_region
      %s32 = ssub.s32 1024, 1024
      %33 = vsyncadd [#allocation9], %s32
      %s34 = sshll.u32 [#allocation8], 4
      %s35 = int_to_ptr.vmem [resolvable:$true] %s34
      %40 = dma.hbm_to_vmem [thread:$0]  %s1, 1024, %s35, [#allocation9], 128, 128, 8
    $region9: #{tpu_custom_call.1} parent=1 // pred_fallthru
      _
    // Predicated region
    $region10: #{tpu_custom_call.1} parent=1 // pred_check
      _
    $region11: #{tpu_custom_call.1} parent=1 // pred_check_branch
      %42 = sbr.rel (0) target = $region13
    $region12: #{tpu_custom_call.1} parent=1 // pred_region
      _
    $region13: #{tpu_custom_call.1} parent=1 // pred_fallthru
      _
    // Predicated region
    $region14: #{tpu_custom_call.1} parent=1 // pred_check
      _
    $region15: #{tpu_custom_call.1} parent=1 // pred_check_branch
      %44 = sbr.rel (0) target = $region17
    $region16: #{tpu_custom_call.1} parent=1 // pred_region
      %s46 = ssub.s32 16, 16
      %47 = vsyncadd [#allocation6], %s46
      %50 = dma.hbm_to_smem %s3, 16, [#allocation10], [#allocation6]
    $region17: #{tpu_custom_call.1} parent=1 // pred_fallthru
      _
    // Predicated region
    $region18: #{tpu_custom_call.1} parent=1 // pred_check
      _
    $region19: #{tpu_custom_call.1} parent=1 // pred_check_branch
      %52 = sbr.rel (0) target = $region21
    $region20: #{tpu_custom_call.1} parent=1 // pred_region
      %s54 = ssub.s32 16, 16
      %55 = vsyncadd [#allocation12], %s54
      %58 = dma.hbm_to_smem %s4, 16, [#allocation11], [#allocation12]
    $region21: #{tpu_custom_call.1} parent=1 // pred_fallthru
      _
    // Predicated region
    $region22: #{tpu_custom_call.1} parent=1 // pred_check
      _
    $region23: #{tpu_custom_call.1} parent=1 // pred_check_branch
      %60 = sbr.rel (0) target = $region25
    $region24: #{tpu_custom_call.1} parent=1 // pred_region
      %s62 = ssub.s32 128, 128
      %63 = vsyncadd [#allocation7], %s62
      %s65 = sshll.u32 %s5, 4
      %s66 = int_to_ptr.vmem [resolvable:$true] %s65
      %68 = dma.vmem_to_smem %s66, 128, [#allocation13], [#allocation7]
    $region25: #{tpu_custom_call.1} parent=1 // pred_fallthru
      _
    // Predicated region
    $region26: #{tpu_custom_call.1} parent=1 // pred_check
      _
    $region27: #{tpu_custom_call.1} parent=1 // pred_check_branch
      %70 = sbr.rel (0) target = $region29
    $region28: #{tpu_custom_call.1} parent=1 // pred_region
      %s72 = ssub.s32 16, 16
      %73 = vsyncadd [#allocation15], %s72
      %s75 = sshll.u32 %s6, 4
      %s76 = int_to_ptr.vmem [resolvable:$true] %s75
      %78 = dma.vmem_to_smem %s76, 16, [#allocation14], [#allocation15]
    $region29: #{tpu_custom_call.1} parent=1 // pred_fallthru
      _
    // Predicated region
    $region30: #{tpu_custom_call.1} parent=1 // pred_check
      _
    $region31: #{tpu_custom_call.1} parent=1 // pred_check_branch
      %80 = sbr.rel (0) target = $region33
    $region32: #{tpu_custom_call.1} parent=1 // pred_region
      %81 = dma.done [#allocation4], 64
    $region33: #{tpu_custom_call.1} parent=1 // pred_fallthru
      _
    // Predicated region
    $region34: #{tpu_custom_call.1} parent=1 // pred_check
      _
    $region35: #{tpu_custom_call.1} parent=1 // pred_check_branch
      %83 = sbr.rel (0) target = $region37
    $region36: #{tpu_custom_call.1} parent=1 // pred_region
      %84 = dma.done [#allocation9], 1024
    $region37: #{tpu_custom_call.1} parent=1 // pred_fallthru
      _
    // Predicated region
    $region38: #{tpu_custom_call.1} parent=1 // pred_check
      _
    $region39: #{tpu_custom_call.1} parent=1 // pred_check_branch
      %86 = sbr.rel (0) target = $region41
    $region40: #{tpu_custom_call.1} parent=1 // pred_region
      %87 = dma.done [#allocation6], 16
    $region41: #{tpu_custom_call.1} parent=1 // pred_fallthru
      _
    // Predicated region
    $region42: #{tpu_custom_call.1} parent=1 // pred_check
      _
    $region43: #{tpu_custom_call.1} parent=1 // pred_check_branch
      %89 = sbr.rel (0) target = $region45
    $region44: #{tpu_custom_call.1} parent=1 // pred_region
      %90 = dma.done [#allocation12], 16
    $region45: #{tpu_custom_call.1} parent=1 // pred_fallthru
      _
    // Predicated region
    $region46: #{tpu_custom_call.1} parent=1 // pred_check
      _
    $region47: #{tpu_custom_call.1} parent=1 // pred_check_branch
      %92 = sbr.rel (0) target = $region49
    $region48: #{tpu_custom_call.1} parent=1 // pred_region
      %93 = dma.done [#allocation7], 128
    $region49: #{tpu_custom_call.1} parent=1 // pred_fallthru
      _
    // Predicated region
    $region50: #{tpu_custom_call.1} parent=1 // pred_check
      _
    $region51: #{tpu_custom_call.1} parent=1 // pred_check_branch
      %95 = sbr.rel (0) target = $region53
    $region52: #{tpu_custom_call.1} parent=1 // pred_region
      %96 = dma.done [#allocation15], 16
    $region53: #{tpu_custom_call.1} parent=1 // pred_fallthru
      _
    %97 = sfence
    %v98 = vld [vmem:[#allocation3] sm:$0xf]
    %v99 = vld [vmem:[#allocation8] sm:$0xff]
    %v100 = vld [vmem:[#allocation8 + $0x8] sm:$0xff]
    %v101 = vld [vmem:[#allocation8 + $0x10] sm:$0xff]
    %v102 = vld [vmem:[#allocation8 + $0x18] sm:$0xff]
    %v103 = vld [vmem:[#allocation8 + $0x20] sm:$0xff]
    %v104 = vld [vmem:[#allocation8 + $0x28] sm:$0xff]
    %v105 = vld [vmem:[#allocation8 + $0x30] sm:$0xff]
    %v106 = vld [vmem:[#allocation8 + $0x38] sm:$0xff]
    %v107 = vld [vmem:[%s2] sm:$0x1]
    %v109 = vlaneseq
    %v110 = vshrl.u32 %v109, 7
    %v111 = vsub.s32 0, %v110
    %v112 = vrot.slane %v107, %v111
    %vm114 = vcmask 523264
    %v116 = vsel %vm114, %v98, 0
    %118 = vmatprep.subr.mxu0 0.0
    %119 = vmatpush1.msra.mxu0 0.0
    %120 = vmatprep.subr.mxu0 0.0
    %121 = vmatpush1.msra.mxu0 0.0
    %122 = vmatprep.subr.mxu0 0.0
    %123 = vmatpush1.msra.mxu0 0.0
    %124 = vmatprep.subr.mxu0 0.0
    %125 = vmatpush1.msra.mxu0 0.0
    %126 = vmatprep.subr.mxu0 0.0
    %127 = vmatpush1.msra.mxu0 0.0
    %128 = vmatprep.subr.mxu0 0.0
    %129 = vmatpush1.msra.mxu0 0.0
    %130 = vmatprep.subr.mxu0 0.0
    %131 = vmatpush1.msra.mxu0 0.0
    %132 = vmatprep.subr.mxu0 0.0
    %133 = vmatpush1.msra.mxu0 0.0
    %134 = vmatprep.subr.mxu0 0.0
    %135 = vmatpush1.msra.mxu0 %v106
    %136 = vmatprep.subr.mxu0 0.0
    %137 = vmatpush1.msra.mxu0 %v105
    %138 = vmatprep.subr.mxu0 0.0
    %139 = vmatpush1.msra.mxu0 %v104
    %140 = vmatprep.subr.mxu0 0.0
    %141 = vmatpush1.msra.mxu0 %v103
    %142 = vmatprep.subr.mxu0 0.0
    %143 = vmatpush1.msra.mxu0 %v102
    %144 = vmatprep.subr.mxu0 0.0
    %145 = vmatpush1.msra.mxu0 %v101
    %146 = vmatprep.subr.mxu0 0.0
    %147 = vmatpush1.msra.mxu0 %v100
    %148 = vmatprep.subr.mxu0 0.0
    %149 = vmatpush1.msra.mxu0 %v99
    %150 = vmatprep.subr.mxu0 0.0
    %151 = vmatpush2.msra.mxu0 0.0
    %152 = vmatprep.subr.mxu0 0.0
    %153 = vmatpush2.msra.mxu0 0.0
    %154 = vmatprep.subr.mxu0 0.0
    %155 = vmatpush2.msra.mxu0 0.0
    %156 = vmatprep.subr.mxu0 0.0
    %157 = vmatpush2.msra.mxu0 0.0
    %158 = vmatprep.subr.mxu0 0.0
    %159 = vmatpush2.msra.mxu0 0.0
    %160 = vmatprep.subr.mxu0 0.0
    %161 = vmatpush2.msra.mxu0 0.0
    %162 = vmatprep.subr.mxu0 0.0
    %163 = vmatpush2.msra.mxu0 0.0
    %164 = vmatprep.subr.mxu0 0.0
    %165 = vmatpush2.msra.mxu0 0.0
    %166 = vmatprep.subr.mxu0 0.0
    %167 = vmatpush2.msra.mxu0 0.0
    %168 = vmatprep.subr.mxu0 0.0
    %169 = vmatpush2.msra.mxu0 0.0
    %170 = vmatprep.subr.mxu0 0.0
    %171 = vmatpush2.msra.mxu0 0.0
    %172 = vmatprep.subr.mxu0 0.0
    %173 = vmatpush2.msra.mxu0 0.0
    %174 = vmatprep.subr.mxu0 0.0
    %175 = vmatpush2.msra.mxu0 0.0
    %176 = vmatprep.subr.mxu0 0.0
    %177 = vmatpush2.msra.mxu0 0.0
    %178 = vmatprep.subr.mxu0 0.0
    %179 = vmatpush2.msra.mxu0 0.0
    %180 = vmatprep.subr.mxu0 0.0
    %181 = vmatpush2.msra.mxu0 0.0
    %182 = vmatprep.mubr.f32.mxu0 0.0
    %183 = vmatmul.mubr.f32.gmra.mxu0 %v116
    %v184 = vpop.f32.mrf.mxu0
    %v185 = vadd.f32 %v112, %v184
    %v186 = vpop.f32.mrf.mxu0
    %187 = vdwg.mxu0
    %v188 = vmax.f32 %v185, 0.0
    %189 = vst [vmem:[#allocation2] sm:$0xf] %v188
    %s190 = sld [smem:[#allocation10]]
    %s191 = sld [smem:[#allocation10 + $0x1]]
    %s192 = sld [smem:[#allocation10 + $0x2]]
    %s193 = sld [smem:[#allocation10 + $0x3]]
    %s194 = sld [smem:[#allocation10 + $0x4]]
    %s195 = sld [smem:[#allocation10 + $0x5]]
    %s196 = sld [smem:[#allocation10 + $0x6]]
    %s197 = sld [smem:[#allocation10 + $0x7]]
    %s198 = sld [smem:[#allocation11]]
    %s199 = sld [smem:[#allocation11 + $0x1]]
    %s200 = sld [smem:[#allocation11 + $0x2]]
    %s201 = sld [smem:[#allocation11 + $0x3]]
    %s202 = sld [smem:[#allocation11 + $0x4]]
    %s203 = sld [smem:[#allocation11 + $0x5]]
    %s204 = sld [smem:[#allocation11 + $0x6]]
    %s205 = sld [smem:[#allocation11 + $0x7]]
    %s206 = sld [smem:[#allocation14]]
    %s207 = sld [smem:[#allocation14 + $0x1]]
    %s208 = sld [smem:[#allocation14 + $0x2]]
    %s209 = sld [smem:[#allocation14 + $0x3]]
    %s210 = sld [smem:[#allocation14 + $0x4]]
    %s211 = sld [smem:[#allocation14 + $0x5]]
    %s212 = sld [smem:[#allocation14 + $0x6]]
    %s213 = sld [smem:[#allocation14 + $0x7]]
    %s214 = sld [smem:[#allocation13]]
    %s215 = sld [smem:[#allocation13 + $0x1]]
    %s216 = sld [smem:[#allocation13 + $0x2]]
    %s217 = sld [smem:[#allocation13 + $0x3]]
    %s218 = sld [smem:[#allocation13 + $0x4]]
    %s219 = sld [smem:[#allocation13 + $0x5]]
    %s220 = sld [smem:[#allocation13 + $0x6]]
    %s221 = sld [smem:[#allocation13 + $0x7]]
    %s222 = sld [smem:[#allocation13 + $0x80]]
    %s223 = sld [smem:[#allocation13 + $0x81]]
    %s224 = sld [smem:[#allocation13 + $0x82]]
    %s225 = sld [smem:[#allocation13 + $0x83]]
    %s226 = sld [smem:[#allocation13 + $0x84]]
    %s227 = sld [smem:[#allocation13 + $0x85]]
    %s228 = sld [smem:[#allocation13 + $0x86]]
    %s229 = sld [smem:[#allocation13 + $0x87]]
    %s230 = sld [smem:[#allocation13 + $0x100]]
    %s231 = sld [smem:[#allocation13 + $0x101]]
    %s232 = sld [smem:[#allocation13 + $0x102]]
    %s233 = sld [smem:[#allocation13 + $0x103]]
    %s234 = sld [smem:[#allocation13 + $0x104]]
    %s235 = sld [smem:[#allocation13 + $0x105]]
    %s236 = sld [smem:[#allocation13 + $0x106]]
    %s237 = sld [smem:[#allocation13 + $0x107]]
    %s238 = sld [smem:[#allocation13 + $0x180]]
    %s239 = sld [smem:[#allocation13 + $0x181]]
    %s240 = sld [smem:[#allocation13 + $0x182]]
    %s241 = sld [smem:[#allocation13 + $0x183]]
    %s242 = sld [smem:[#allocation13 + $0x184]]
    %s243 = sld [smem:[#allocation13 + $0x185]]
    %s244 = sld [smem:[#allocation13 + $0x186]]
    %s245 = sld [smem:[#allocation13 + $0x187]]
    %s246 = sld [smem:[#allocation13 + $0x200]]
    %s247 = sld [smem:[#allocation13 + $0x201]]
    %s248 = sld [smem:[#allocation13 + $0x202]]
    %s249 = sld [smem:[#allocation13 + $0x203]]
    %s250 = sld [smem:[#allocation13 + $0x204]]
    %s251 = sld [smem:[#allocation13 + $0x205]]
    %s252 = sld [smem:[#allocation13 + $0x206]]
    %s253 = sld [smem:[#allocation13 + $0x207]]
    %s254 = sld [smem:[#allocation13 + $0x280]]
    %s255 = sld [smem:[#allocation13 + $0x281]]
    %s256 = sld [smem:[#allocation13 + $0x282]]
    %s257 = sld [smem:[#allocation13 + $0x283]]
    %s258 = sld [smem:[#allocation13 + $0x284]]
    %s259 = sld [smem:[#allocation13 + $0x285]]
    %s260 = sld [smem:[#allocation13 + $0x286]]
    %s261 = sld [smem:[#allocation13 + $0x287]]
    %s262 = sld [smem:[#allocation13 + $0x300]]
    %s263 = sld [smem:[#allocation13 + $0x301]]
    %s264 = sld [smem:[#allocation13 + $0x302]]
    %s265 = sld [smem:[#allocation13 + $0x303]]
    %s266 = sld [smem:[#allocation13 + $0x304]]
    %s267 = sld [smem:[#allocation13 + $0x305]]
    %s268 = sld [smem:[#allocation13 + $0x306]]
    %s269 = sld [smem:[#allocation13 + $0x307]]
    %s270 = sld [smem:[#allocation13 + $0x380]]
    %s271 = sld [smem:[#allocation13 + $0x381]]
    %s272 = sld [smem:[#allocation13 + $0x382]]
    %s273 = sld [smem:[#allocation13 + $0x383]]
    %s274 = sld [smem:[#allocation13 + $0x384]]
    %s275 = sld [smem:[#allocation13 + $0x385]]
    %s276 = sld [smem:[#allocation13 + $0x386]]
    %s277 = sld [smem:[#allocation13 + $0x387]]
    %v278 = vld [vmem:[#allocation2] sm:$0xf]
    %v279 = vstv %s190
    %v280 = vmul.f32 %v278, %v279
    %v281 = vstv %s198
    %v282 = vadd.f32 %v280, %v281
    %v283 = vmax.f32 %v282, 0.0
    %v284 = vstv %s191
    %v285 = vmul.f32 %v278, %v284
    %v286 = vstv %s199
    %v287 = vadd.f32 %v285, %v286
    %v288 = vmax.f32 %v287, 0.0
    %v289 = vstv %s192
    %v290 = vmul.f32 %v278, %v289
    %v291 = vstv %s200
    %v292 = vadd.f32 %v290, %v291
    %v293 = vmax.f32 %v292, 0.0
    %v294 = vstv %s193
    %v295 = vmul.f32 %v278, %v294
    %v296 = vstv %s201
    %v297 = vadd.f32 %v295, %v296
    %v298 = vmax.f32 %v297, 0.0
    %v299 = vstv %s194
    %v300 = vmul.f32 %v278, %v299
    %v301 = vstv %s202
    %v302 = vadd.f32 %v300, %v301
    %v303 = vmax.f32 %v302, 0.0
    %v304 = vstv %s195
    %v305 = vmul.f32 %v278, %v304
    %v306 = vstv %s203
    %v307 = vadd.f32 %v305, %v306
    %v308 = vmax.f32 %v307, 0.0
    %v309 = vstv %s196
    %v310 = vmul.f32 %v278, %v309
    %v311 = vstv %s204
    %v312 = vadd.f32 %v310, %v311
    %v313 = vmax.f32 %v312, 0.0
    %v314 = vstv %s197
    %v315 = vmul.f32 %v278, %v314
    %v316 = vstv %s205
    %v317 = vadd.f32 %v315, %v316
    %v318 = vmax.f32 %v317, 0.0
    %v319 = vstv %s214
    %v320 = vmul.f32 %v283, %v319
    %v321 = vstv %s206
    %v322 = vadd.f32 %v320, %v321
    %v323 = vstv %s215
    %v324 = vmul.f32 %v288, %v323
    %v325 = vadd.f32 %v322, %v324
    %v326 = vstv %s216
    %v327 = vmul.f32 %v293, %v326
    %v328 = vadd.f32 %v325, %v327
    %v329 = vstv %s217
    %v330 = vmul.f32 %v298, %v329
    %v331 = vadd.f32 %v328, %v330
    %v332 = vstv %s218
    %v333 = vmul.f32 %v303, %v332
    %v334 = vadd.f32 %v331, %v333
    %v335 = vstv %s219
    %v336 = vmul.f32 %v308, %v335
    %v337 = vadd.f32 %v334, %v336
    %v338 = vstv %s220
    %v339 = vmul.f32 %v313, %v338
    %v340 = vadd.f32 %v337, %v339
    %v341 = vstv %s221
    %v342 = vmul.f32 %v318, %v341
    %v343 = vadd.f32 %v340, %v342
    %v344 = vmax.f32 %v343, 0.0
    %v345 = vstv %s222
    %v346 = vmul.f32 %v283, %v345
    %v347 = vstv %s207
    %v348 = vadd.f32 %v346, %v347
    %v349 = vstv %s223
    %v350 = vmul.f32 %v288, %v349
    %v351 = vadd.f32 %v348, %v350
    %v352 = vstv %s224
    %v353 = vmul.f32 %v293, %v352
    %v354 = vadd.f32 %v351, %v353
    %v355 = vstv %s225
    %v356 = vmul.f32 %v298, %v355
    %v357 = vadd.f32 %v354, %v356
    %v358 = vstv %s226
    %v359 = vmul.f32 %v303, %v358
    %v360 = vadd.f32 %v357, %v359
    %v361 = vstv %s227
    %v362 = vmul.f32 %v308, %v361
    %v363 = vadd.f32 %v360, %v362
    %v364 = vstv %s228
    %v365 = vmul.f32 %v313, %v364
    %v366 = vadd.f32 %v363, %v365
    %v367 = vstv %s229
    %v368 = vmul.f32 %v318, %v367
    %v369 = vadd.f32 %v366, %v368
    %v370 = vmax.f32 %v369, 0.0
    %v371 = vadd.f32 %v344, %v370
    %v372 = vstv %s230
    %v373 = vmul.f32 %v283, %v372
    %v374 = vstv %s208
    %v375 = vadd.f32 %v373, %v374
    %v376 = vstv %s231
    %v377 = vmul.f32 %v288, %v376
    %v378 = vadd.f32 %v375, %v377
    %v379 = vstv %s232
    %v380 = vmul.f32 %v293, %v379
    %v381 = vadd.f32 %v378, %v380
    %v382 = vstv %s233
    %v383 = vmul.f32 %v298, %v382
    %v384 = vadd.f32 %v381, %v383
    %v385 = vstv %s234
    %v386 = vmul.f32 %v303, %v385
    %v387 = vadd.f32 %v384, %v386
    %v388 = vstv %s235
    %v389 = vmul.f32 %v308, %v388
    %v390 = vadd.f32 %v387, %v389
    %v391 = vstv %s236
    %v392 = vmul.f32 %v313, %v391
    %v393 = vadd.f32 %v390, %v392
    %v394 = vstv %s237
    %v395 = vmul.f32 %v318, %v394
    %v396 = vadd.f32 %v393, %v395
    %v397 = vmax.f32 %v396, 0.0
    %v398 = vadd.f32 %v371, %v397
    %v399 = vstv %s238
    %v400 = vmul.f32 %v283, %v399
    %v401 = vstv %s209
    %v402 = vadd.f32 %v400, %v401
    %v403 = vstv %s239
    %v404 = vmul.f32 %v288, %v403
    %v405 = vadd.f32 %v402, %v404
    %v406 = vstv %s240
    %v407 = vmul.f32 %v293, %v406
    %v408 = vadd.f32 %v405, %v407
    %v409 = vstv %s241
    %v410 = vmul.f32 %v298, %v409
    %v411 = vadd.f32 %v408, %v410
    %v412 = vstv %s242
    %v413 = vmul.f32 %v303, %v412
    %v414 = vadd.f32 %v411, %v413
    %v415 = vstv %s243
    %v416 = vmul.f32 %v308, %v415
    %v417 = vadd.f32 %v414, %v416
    %v418 = vstv %s244
    %v419 = vmul.f32 %v313, %v418
    %v420 = vadd.f32 %v417, %v419
    %v421 = vstv %s245
    %v422 = vmul.f32 %v318, %v421
    %v423 = vadd.f32 %v420, %v422
    %v424 = vmax.f32 %v423, 0.0
    %v425 = vadd.f32 %v398, %v424
    %v426 = vstv %s246
    %v427 = vmul.f32 %v283, %v426
    %v428 = vstv %s210
    %v429 = vadd.f32 %v427, %v428
    %v430 = vstv %s247
    %v431 = vmul.f32 %v288, %v430
    %v432 = vadd.f32 %v429, %v431
    %v433 = vstv %s248
    %v434 = vmul.f32 %v293, %v433
    %v435 = vadd.f32 %v432, %v434
    %v436 = vstv %s249
    %v437 = vmul.f32 %v298, %v436
    %v438 = vadd.f32 %v435, %v437
    %v439 = vstv %s250
    %v440 = vmul.f32 %v303, %v439
    %v441 = vadd.f32 %v438, %v440
    %v442 = vstv %s251
    %v443 = vmul.f32 %v308, %v442
    %v444 = vadd.f32 %v441, %v443
    %v445 = vstv %s252
    %v446 = vmul.f32 %v313, %v445
    %v447 = vadd.f32 %v444, %v446
    %v448 = vstv %s253
    %v449 = vmul.f32 %v318, %v448
    %v450 = vadd.f32 %v447, %v449
    %v451 = vmax.f32 %v450, 0.0
    %v452 = vadd.f32 %v425, %v451
    %v453 = vstv %s254
    %v454 = vmul.f32 %v283, %v453
    %v455 = vstv %s211
    %v456 = vadd.f32 %v454, %v455
    %v457 = vstv %s255
    %v458 = vmul.f32 %v288, %v457
    %v459 = vadd.f32 %v456, %v458
    %v460 = vstv %s256
    %v461 = vmul.f32 %v293, %v460
    %v462 = vadd.f32 %v459, %v461
    %v463 = vstv %s257
    %v464 = vmul.f32 %v298, %v463
    %v465 = vadd.f32 %v462, %v464
    %v466 = vstv %s258
    %v467 = vmul.f32 %v303, %v466
    %v468 = vadd.f32 %v465, %v467
    %v469 = vstv %s259
    %v470 = vmul.f32 %v308, %v469
    %v471 = vadd.f32 %v468, %v470
    %v472 = vstv %s260
    %v473 = vmul.f32 %v313, %v472
    %v474 = vadd.f32 %v471, %v473
    %v475 = vstv %s261
    %v476 = vmul.f32 %v318, %v475
    %v477 = vadd.f32 %v474, %v476
    %v478 = vmax.f32 %v477, 0.0
    %v479 = vadd.f32 %v452, %v478
    %v480 = vstv %s262
    %v481 = vmul.f32 %v283, %v480
    %v482 = vstv %s212
    %v483 = vadd.f32 %v481, %v482
    %v484 = vstv %s263
    %v485 = vmul.f32 %v288, %v484
    %v486 = vadd.f32 %v483, %v485
    %v487 = vstv %s264
    %v488 = vmul.f32 %v293, %v487
    %v489 = vadd.f32 %v486, %v488
    %v490 = vstv %s265
    %v491 = vmul.f32 %v298, %v490
    %v492 = vadd.f32 %v489, %v491
    %v493 = vstv %s266
    %v494 = vmul.f32 %v303, %v493
    %v495 = vadd.f32 %v492, %v494
    %v496 = vstv %s267
    %v497 = vmul.f32 %v308, %v496
    %v498 = vadd.f32 %v495, %v497
    %v499 = vstv %s268
    %v500 = vmul.f32 %v313, %v499
    %v501 = vadd.f32 %v498, %v500
    %v502 = vstv %s269
    %v503 = vmul.f32 %v318, %v502
    %v504 = vadd.f32 %v501, %v503
    %v505 = vmax.f32 %v504, 0.0
    %v506 = vadd.f32 %v479, %v505
    %v507 = vstv %s270
    %v508 = vmul.f32 %v283, %v507
    %v509 = vstv %s213
    %v510 = vadd.f32 %v508, %v509
    %v511 = vstv %s271
    %v512 = vmul.f32 %v288, %v511
    %v513 = vadd.f32 %v510, %v512
    %v514 = vstv %s272
    %v515 = vmul.f32 %v293, %v514
    %v516 = vadd.f32 %v513, %v515
    %v517 = vstv %s273
    %v518 = vmul.f32 %v298, %v517
    %v519 = vadd.f32 %v516, %v518
    %v520 = vstv %s274
    %v521 = vmul.f32 %v303, %v520
    %v522 = vadd.f32 %v519, %v521
    %v523 = vstv %s275
    %v524 = vmul.f32 %v308, %v523
    %v525 = vadd.f32 %v522, %v524
    %v526 = vstv %s276
    %v527 = vmul.f32 %v313, %v526
    %v528 = vadd.f32 %v525, %v527
    %v529 = vstv %s277
    %v530 = vmul.f32 %v318, %v529
    %v531 = vadd.f32 %v528, %v530
    %v532 = vmax.f32 %v531, 0.0
    %v533 = vadd.f32 %v506, %v532
    %534 = vst [vmem:[#allocation16] sm:$0xf] %v533
    // Predicated region
    $region54: #{tpu_custom_call.1} parent=1 // pred_check
      _
    $region55: #{tpu_custom_call.1} parent=1 // pred_check_branch
      %536 = sbr.rel (0) target = $region57
    $region56: #{tpu_custom_call.1} parent=1 // pred_region
      %s538 = ssub.s32 64, 64
      %539 = vsyncadd [#allocation5], %s538
      %s541 = sshll.u32 [#allocation16], 4
      %s542 = int_to_ptr.vmem [resolvable:$true] %s541
      %544 = dma.vmem_to_hbm [thread:$0]  %s542, 64, %s7, [#allocation5]
    $region57: #{tpu_custom_call.1} parent=1 // pred_fallthru
      _
    // Predicated region
    $region58: #{tpu_custom_call.1} parent=1 // pred_check
      _
    $region59: #{tpu_custom_call.1} parent=1 // pred_check_branch
      %546 = sbr.rel (0) target = $region61
    $region60: #{tpu_custom_call.1} parent=1 // pred_region
      %547 = dma.done [#allocation5], 64
    $region61: #{tpu_custom_call.1} parent=1 // pred_fallthru
      _
    %548 = vsyncpa [#allocation4], 1
    %549 = vsyncpa [#allocation9], 1
    %550 = vsyncpa [#allocation5], 1
    %551 = vsyncpa [#allocation6], 1
    %552 = vsyncpa [#allocation12], 1
    %553 = vsyncpa [#allocation7], 1
    %554 = vsyncpa [#allocation15], 1

</llo_original>
